<compile_context>
chip_gen: v7x
topology: tpu7x:2x2x1
jax: 0.10.0
libtpu: 0.0.40
codegen_flags: <defaults>
</compile_context>

<pallas_src>
import jax
import jax.numpy as jnp
from jax import lax
from jax.experimental import pallas as pl
from jax.experimental.pallas import tpu as pltpu


# -----------------------------------------------------------------------------
# Kernel: full-sequence LSTM forward (one grid step per character).
# -----------------------------------------------------------------------------
def lstm_seq_kernel(chars_ref,                      # SMEM  [T, B] int32 (scalar prefetch)
                    h0_ref, c0_ref,                 # VMEM  [B, H]
                    emb_ref,                        # VMEM  [V, E]
                    wcat_ref,                       # VMEM  [E+H, 4H]  (gate order i,f,o,g)
                    b_ref,                          # VMEM  [1, 4H]    (b_ih + b_hh, reordered)
                    wlin_ref,                       # VMEM  [H, Vp]    (Vp = padded vocab, 128)
                    blin_ref,                       # VMEM  [1, Vp]
                    out_ref,                        # VMEM  [1, B, Vp] (block at step t)
                    hout_ref, cout_ref,             # VMEM  [B, H]     (final states)
                    h_scr, c_scr):                  # VMEM scratch [B, H]
    t = pl.program_id(0)
    T = pl.num_programs(0)
    B, H = h_scr.shape

    # Initialise the carried state from the inputs on the first step.
    @pl.when(t == 0)
    def _():
        h_scr[...] = h0_ref[...]
        c_scr[...] = c0_ref[...]

    # In-kernel embedding gather: indices come from SMEM, table is VMEM-resident.
    rows = [emb_ref[pl.ds(chars_ref[t, b], 1), :] for b in range(B)]  # B x [1, E]
    x = jnp.concatenate(rows, axis=0)                                 # [B, E]

    h = h_scr[...]
    c = c_scr[...]

    # Single fused gate matmul: [B, E+H] @ [E+H, 4H] + bias.
    xh = jnp.concatenate([x, h], axis=-1)
    gates = (jnp.dot(xh, wcat_ref[...], preferred_element_type=jnp.float32)
             + b_ref[...])                                            # [B, 4H]

    # Gate order is (i, f, o, g): one sigmoid region + one tanh region.
    sig = jax.nn.sigmoid(gates[:, :3 * H])
    i_g = sig[:, 0 * H:1 * H]
    f_g = sig[:, 1 * H:2 * H]
    o_g = sig[:, 2 * H:3 * H]
    g_g = jnp.tanh(gates[:, 3 * H:4 * H])

    c_new = f_g * c + i_g * g_g
    h_new = o_g * jnp.tanh(c_new)

    h_scr[...] = h_new
    c_scr[...] = c_new

    # Lane-dense (padded-to-128) logits for this step.
    out_ref[0] = (jnp.dot(h_new, wlin_ref[...], preferred_element_type=jnp.float32)
                  + blin_ref[...])

    # Write the final states back only once, at the last step.
    @pl.when(t == T - 1)
    def _():
        hout_ref[...] = h_new
        cout_ref[...] = c_new


# -----------------------------------------------------------------------------
# Wrappers
# -----------------------------------------------------------------------------
def rnn_forward_seq(chars, h0, c0, params, vocab_size):
    """Runs the RNN.forward step for every char in `chars` ([T, B] int32).

    Returns (logits [T, B, V], hidden_state [B, H], cell_state [B, H]) —
    i.e. the result of calling the PyTorch module's forward() T times while
    threading the hidden/cell state.
    """
    T, B = chars.shape
    H = h0.shape[-1]
    V, E = params["emb"].shape
    Vp = params["wlin"].shape[-1]
    EH = E + H

    const = lambda shape: pl.BlockSpec(shape, lambda t, ch: tuple(0 for _ in shape))

    grid_spec = pltpu.PrefetchScalarGridSpec(
        num_scalar_prefetch=1,
        grid=(T,),
        in_specs=[
            const((B, H)),        # h0
            const((B, H)),        # c0
            const((V, E)),        # embedding table
            const((EH, 4 * H)),   # fused gate weights
            const((1, 4 * H)),    # fused gate bias
            const((H, Vp)),       # output linear weight (padded)
            const((1, Vp)),       # output linear bias   (padded)
        ],
        out_specs=(
            pl.BlockSpec((1, B, Vp), lambda t, ch: (t, 0, 0)),  # per-step logits
            pl.BlockSpec((B, H), lambda t, ch: (0, 0)),         # final h
            pl.BlockSpec((B, H), lambda t, ch: (0, 0)),         # final c
        ),
        scratch_shapes=[pltpu.VMEM((B, H), jnp.float32),
                        pltpu.VMEM((B, H), jnp.float32)],
    )

    logits_pad, h_f, c_f = pl.pallas_call(
        lstm_seq_kernel,
        grid_spec=grid_spec,
        out_shape=(
            jax.ShapeDtypeStruct((T, B, Vp), jnp.float32),
            jax.ShapeDtypeStruct((B, H), jnp.float32),
            jax.ShapeDtypeStruct((B, H), jnp.float32),
        ),
        compiler_params=pltpu.CompilerParams(
            dimension_semantics=("arbitrary",)),   # sequential carry over time
    )(chars, h0, c0, params["emb"], params["w_cat"], params["b"],
      params["wlin"], params["blin"])

    return logits_pad[..., :vocab_size], h_f, c_f


def rnn_forward(char_ix, hidden_state, cell_state, params, vocab_size):
    """Exact analogue of RNN.forward (single step, batched): returns
    (output [B, V], hidden_state [B, H], cell_state [B, H])."""
    chars = char_ix.reshape(1, -1).astype(jnp.int32)
    logits, h, c = rnn_forward_seq(chars, hidden_state, cell_state, params,
                                   vocab_size)
    return logits[0], h, c


# -----------------------------------------------------------------------------
# Parameters (PyTorch-like init) + pure-JAX reference
# -----------------------------------------------------------------------------
def make_params(key, vocab_size, embedding_dim, hidden_size, v_pad=128):
    k = jax.random.split(key, 7)
    H, E, V = hidden_size, embedding_dim, vocab_size
    s = 1.0 / jnp.sqrt(H)

    emb = jax.random.normal(k[0], (V, E), jnp.float32)
    w_ih = jax.random.uniform(k[1], (4 * H, E), jnp.float32, -s, s)
    w_hh = jax.random.uniform(k[2], (4 * H, H), jnp.float32, -s, s)
    b_ih = jax.random.uniform(k[3], (4 * H,), jnp.float32, -s, s)
    b_hh = jax.random.uniform(k[4], (4 * H,), jnp.float32, -s, s)
    w_lin = jax.random.uniform(k[5], (V, H), jnp.float32, -s, s)
    b_lin = jax.random.uniform(k[6], (V,), jnp.float32, -s, s)

    raw = {"emb": emb, "w_ih": w_ih, "w_hh": w_hh, "b_ih": b_ih,
           "b_hh": b_hh, "w_lin": w_lin, "b_lin": b_lin}

    # Reorder gates from PyTorch (i, f, g, o) to (i, f, o, g).
    perm = jnp.concatenate([jnp.arange(0, H), jnp.arange(H, 2 * H),
                            jnp.arange(3 * H, 4 * H), jnp.arange(2 * H, 3 * H)])
    w_ih_r = w_ih[perm]
    w_hh_r = w_hh[perm]
    b_r = (b_ih + b_hh)[perm]

    # Fused gate weights [E+H, 4H], padded lane-dense output weights [H, Vp].
    w_cat = jnp.concatenate([w_ih_r.T, w_hh_r.T], axis=0)
    wlin_pad = jnp.zeros((H, v_pad), jnp.float32).at[:, :V].set(w_lin.T)
    blin_pad = jnp.zeros((1, v_pad), jnp.float32).at[:, :V].set(b_lin)

    kernel_params = {"emb": emb, "w_cat": w_cat, "b": b_r[None, :],
                     "wlin": wlin_pad, "blin": blin_pad}
    return kernel_params, raw


def rnn_forward_ref_seq(chars, h0, c0, raw):
    """Pure-JAX reference: PyTorch LSTMCell semantics, scanned over time."""
    H = h0.shape[-1]

    def step(carry, ch):
        h, c = carry
        x = jnp.take(raw["emb"], ch, axis=0)
        gates = x @ raw["w_ih"].T + h @ raw["w_hh"].T + raw["b_ih"] + raw["b_hh"]
        i_g = jax.nn.sigmoid(gates[:, 0 * H:1 * H])
        f_g = jax.nn.sigmoid(gates[:, 1 * H:2 * H])
        g_g = jnp.tanh(gates[:, 2 * H:3 * H])
        o_g = jax.nn.sigmoid(gates[:, 3 * H:4 * H])
        c_new = f_g * c + i_g * g_g
        h_new = o_g * jnp.tanh(c_new)
        out = h_new @ raw["w_lin"].T + raw["b_lin"]
        return (h_new, c_new), out

    (h_f, c_f), outs = lax.scan(step, (h0, c0), chars)
    return outs, h_f, c_f


# -----------------------------------------------------------------------------
# Self-test
# -----------------------------------------------------------------------------
if __name__ == "__main__":
    VOCAB = 30
    EMB_DIM = 16
    HIDDEN = 32
    BATCH = 8      # fills vreg sublanes; B=1 reproduces the unbatched module
    SEQ = 12

    key = jax.random.PRNGKey(0)
    kp, kc = jax.random.split(key, 2)

    params, raw = make_params(kp, VOCAB, EMB_DIM, HIDDEN)
    chars = jax.random.randint(kc, (SEQ, BATCH), 0, VOCAB, dtype=jnp.int32)

    # _init_zero_state() analogue (batched).
    h0 = jnp.zeros((BATCH, HIDDEN), jnp.float32)
    c0 = jnp.zeros((BATCH, HIDDEN), jnp.float32)

    # Full-sequence kernel (time loop inside the kernel).
    logits, h_f, c_f = rnn_forward_seq(chars, h0, c0, params, VOCAB)
    jax.block_until_ready((logits, h_f, c_f))

    logits_r, h_r, c_r = rnn_forward_ref_seq(chars, h0, c0, raw)
    assert jnp.allclose(logits, logits_r, atol=1e-4, rtol=1e-3), \
        float(jnp.max(jnp.abs(logits - logits_r)))
    assert jnp.allclose(h_f, h_r, atol=1e-4, rtol=1e-3)
    assert jnp.allclose(c_f, c_r, atol=1e-4, rtol=1e-3)

    # Single-step path == the module's forward(char, h, c).
    out1, h1, c1 = rnn_forward(chars[0], h0, c0, params, VOCAB)
    out1_r, h1_r, c1_r = rnn_forward_ref_seq(chars[:1], h0, c0, raw)
    assert jnp.allclose(out1, out1_r[0], atol=1e-4, rtol=1e-3)
    assert jnp.allclose(h1, h1_r, atol=1e-4, rtol=1e-3)
    assert jnp.allclose(c1, c1_r, atol=1e-4, rtol=1e-3)

    print("KERNEL_OK")
</pallas_src>

<mosaic_0001>
module attributes {stable_mosaic.version = 11 : i64} {
  func.func @lstm_seq_kernel(%arg0: i32, %arg1: memref<12x8xi32, #tpu.memory_space<smem>>, %arg2: memref<8x32xf32, #tpu.memory_space<vmem>>, %arg3: memref<8x32xf32, #tpu.memory_space<vmem>>, %arg4: memref<30x16xf32, #tpu.memory_space<vmem>>, %arg5: memref<48x128xf32, #tpu.memory_space<vmem>>, %arg6: memref<1x128xf32, #tpu.memory_space<vmem>>, %arg7: memref<32x128xf32, #tpu.memory_space<vmem>>, %arg8: memref<1x128xf32, #tpu.memory_space<vmem>>, %arg9: memref<1x8x128xf32, #tpu.memory_space<vmem>>, %arg10: memref<8x32xf32, #tpu.memory_space<vmem>>, %arg11: memref<8x32xf32, #tpu.memory_space<vmem>>, %arg12: memref<8x32xf32, #tpu.memory_space<vmem>>, %arg13: memref<8x32xf32, #tpu.memory_space<vmem>>) attributes {dimension_semantics = [#tpu.dimension_semantics<arbitrary>], iteration_bounds = array<i64: 12>, scalar_prefetch = 1 : i64, scratch_operands = 2 : i64, tpu.core_type = #tpu.core_type<tc>, window_params = [{pipeline_mode = #tpu.pipeline_mode<synchronous>, transform_indices = @transform_0, window_bounds = array<i64: 8, 32>}, {pipeline_mode = #tpu.pipeline_mode<synchronous>, transform_indices = @transform_1, window_bounds = array<i64: 8, 32>}, {pipeline_mode = #tpu.pipeline_mode<synchronous>, transform_indices = @transform_2, window_bounds = array<i64: 30, 16>}, {pipeline_mode = #tpu.pipeline_mode<synchronous>, transform_indices = @transform_3, window_bounds = array<i64: 48, 128>}, {pipeline_mode = #tpu.pipeline_mode<synchronous>, transform_indices = @transform_4, window_bounds = array<i64: 1, 128>}, {pipeline_mode = #tpu.pipeline_mode<synchronous>, transform_indices = @transform_5, window_bounds = array<i64: 32, 128>}, {pipeline_mode = #tpu.pipeline_mode<synchronous>, transform_indices = @transform_6, window_bounds = array<i64: 1, 128>}, {transform_indices = @transform_7, window_bounds = array<i64: 1, 8, 128>}, {pipeline_mode = #tpu.pipeline_mode<synchronous>, transform_indices = @transform_8, window_bounds = array<i64: 8, 32>}, {pipeline_mode = #tpu.pipeline_mode<synchronous>, transform_indices = @transform_9, window_bounds = array<i64: 8, 32>}]} {
    %c0_i32 = arith.constant 0 : i32
    %0 = arith.cmpi eq, %arg0, %c0_i32 : i32
    %1 = arith.extui %0 : i1 to i32
    %c0_i32_0 = arith.constant 0 : i32
    %2 = arith.cmpi ne, %1, %c0_i32_0 : i32
    scf.if %2 {
      %c0_31 = arith.constant 0 : index
      %c0_32 = arith.constant 0 : index
      %73 = vector.load %arg2[%c0_31, %c0_32] : memref<8x32xf32, #tpu.memory_space<vmem>>, vector<8x32xf32>
      %c0_33 = arith.constant 0 : index
      %c0_34 = arith.constant 0 : index
      %74 = vector.load %arg12[%c0_33, %c0_34] : memref<8x32xf32, #tpu.memory_space<vmem>>, vector<8x32xf32>
      tpu.vector_store %arg12[%c0_33, %c0_34], %73 {strides = array<i32>} : memref<8x32xf32, #tpu.memory_space<vmem>>, vector<8x32xf32>,
      %c0_35 = arith.constant 0 : index
      %c0_36 = arith.constant 0 : index
      %75 = vector.load %arg3[%c0_35, %c0_36] : memref<8x32xf32, #tpu.memory_space<vmem>>, vector<8x32xf32>
      %c0_37 = arith.constant 0 : index
      %c0_38 = arith.constant 0 : index
      %76 = vector.load %arg13[%c0_37, %c0_38] : memref<8x32xf32, #tpu.memory_space<vmem>>, vector<8x32xf32>
      tpu.vector_store %arg13[%c0_37, %c0_38], %75 {strides = array<i32>} : memref<8x32xf32, #tpu.memory_space<vmem>>, vector<8x32xf32>,
    } else {
    }
    %3 = arith.index_cast %arg0 : i32 to index
    %c0 = arith.constant 0 : index
    %4 = memref.load %arg1[%3, %c0] : memref<12x8xi32, #tpu.memory_space<smem>>
    %5 = arith.index_cast %4 : i32 to index
    %c0_1 = arith.constant 0 : index
    %6 = vector.load %arg4[%5, %c0_1] : memref<30x16xf32, #tpu.memory_space<vmem>>, vector<1x16xf32>
    %7 = arith.index_cast %arg0 : i32 to index
    %c1 = arith.constant 1 : index
    %8 = memref.load %arg1[%7, %c1] : memref<12x8xi32, #tpu.memory_space<smem>>
    %9 = arith.index_cast %8 : i32 to index
    %c0_2 = arith.constant 0 : index
    %10 = vector.load %arg4[%9, %c0_2] : memref<30x16xf32, #tpu.memory_space<vmem>>, vector<1x16xf32>
    %11 = arith.index_cast %arg0 : i32 to index
    %c2 = arith.constant 2 : index
    %12 = memref.load %arg1[%11, %c2] : memref<12x8xi32, #tpu.memory_space<smem>>
    %13 = arith.index_cast %12 : i32 to index
    %c0_3 = arith.constant 0 : index
    %14 = vector.load %arg4[%13, %c0_3] : memref<30x16xf32, #tpu.memory_space<vmem>>, vector<1x16xf32>
    %15 = arith.index_cast %arg0 : i32 to index
    %c3 = arith.constant 3 : index
    %16 = memref.load %arg1[%15, %c3] : memref<12x8xi32, #tpu.memory_space<smem>>
    %17 = arith.index_cast %16 : i32 to index
    %c0_4 = arith.constant 0 : index
    %18 = vector.load %arg4[%17, %c0_4] : memref<30x16xf32, #tpu.memory_space<vmem>>, vector<1x16xf32>
    %19 = arith.index_cast %arg0 : i32 to index
    %c4 = arith.constant 4 : index
    %20 = memref.load %arg1[%19, %c4] : memref<12x8xi32, #tpu.memory_space<smem>>
    %21 = arith.index_cast %20 : i32 to index
    %c0_5 = arith.constant 0 : index
    %22 = vector.load %arg4[%21, %c0_5] : memref<30x16xf32, #tpu.memory_space<vmem>>, vector<1x16xf32>
    %23 = arith.index_cast %arg0 : i32 to index
    %c5 = arith.constant 5 : index
    %24 = memref.load %arg1[%23, %c5] : memref<12x8xi32, #tpu.memory_space<smem>>
    %25 = arith.index_cast %24 : i32 to index
    %c0_6 = arith.constant 0 : index
    %26 = vector.load %arg4[%25, %c0_6] : memref<30x16xf32, #tpu.memory_space<vmem>>, vector<1x16xf32>
    %27 = arith.index_cast %arg0 : i32 to index
    %c6 = arith.constant 6 : index
    %28 = memref.load %arg1[%27, %c6] : memref<12x8xi32, #tpu.memory_space<smem>>
    %29 = arith.index_cast %28 : i32 to index
    %c0_7 = arith.constant 0 : index
    %30 = vector.load %arg4[%29, %c0_7] : memref<30x16xf32, #tpu.memory_space<vmem>>, vector<1x16xf32>
    %31 = arith.index_cast %arg0 : i32 to index
    %c7 = arith.constant 7 : index
    %32 = memref.load %arg1[%31, %c7] : memref<12x8xi32, #tpu.memory_space<smem>>
    %33 = arith.index_cast %32 : i32 to index
    %c0_8 = arith.constant 0 : index
    %34 = vector.load %arg4[%33, %c0_8] : memref<30x16xf32, #tpu.memory_space<vmem>>, vector<1x16xf32>
    %35 = tpu.concatenate %6, %10, %14, %18, %22, %26, %30, %34 in 0 : vector<1x16xf32>, vector<1x16xf32>, vector<1x16xf32>, vector<1x16xf32>, vector<1x16xf32>, vector<1x16xf32>, vector<1x16xf32>, vector<1x16xf32> -> vector<8x16xf32>
    %c0_9 = arith.constant 0 : index
    %c0_10 = arith.constant 0 : index
    %36 = vector.load %arg12[%c0_9, %c0_10] : memref<8x32xf32, #tpu.memory_space<vmem>>, vector<8x32xf32>
    %c0_11 = arith.constant 0 : index
    %c0_12 = arith.constant 0 : index
    %37 = vector.load %arg13[%c0_11, %c0_12] : memref<8x32xf32, #tpu.memory_space<vmem>>, vector<8x32xf32>
    %38 = tpu.concatenate %35, %36 in 1 : vector<8x16xf32>, vector<8x32xf32> -> vector<8x48xf32>
    %c0_13 = arith.constant 0 : index
    %c0_14 = arith.constant 0 : index
    %39 = vector.load %arg5[%c0_13, %c0_14] : memref<48x128xf32, #tpu.memory_space<vmem>>, vector<48x128xf32>
    %cst = arith.constant dense<0.000000e+00> : vector<8x128xf32>
    %40 = tpu.matmul %38, %39, %cst {dimension_numbers = #tpu.dot_dimension_numbers<[1], [0], [0], [1], [0, 0, 1, 1], [], []>} : vector<8x48xf32>, vector<48x128xf32>, vector<8x128xf32> -> vector<8x128xf32>
    %c0_15 = arith.constant 0 : index
    %c0_16 = arith.constant 0 : index
    %41 = vector.load %arg6[%c0_15, %c0_16] : memref<1x128xf32, #tpu.memory_space<vmem>>, vector<1x128xf32>
    %42 = vector.broadcast %41 : vector<1x128xf32> to vector<8x128xf32>
    %43 = arith.addf %40, %42 : vector<8x128xf32>
    %44 = vector.extract_strided_slice %43 {offsets = [0, 0], sizes = [8, 96], strides = [1, 1]} : vector<8x128xf32> to vector<8x96xf32>
    %45 = arith.negf %44 : vector<8x96xf32>
    %46 = math.exp %45 : vector<8x96xf32>
    %cst_17 = arith.constant 1.000000e+00 : f32
    %47 = vector.broadcast %cst_17 : f32 to vector<8x96xf32>
    %48 = arith.addf %47, %46 : vector<8x96xf32>
    %49 = arith.divf %47, %48 : vector<8x96xf32>
    %50 = vector.extract_strided_slice %49 {offsets = [0, 0], sizes = [8, 32], strides = [1, 1]} : vector<8x96xf32> to vector<8x32xf32>
    %51 = vector.extract_strided_slice %49 {offsets = [0, 32], sizes = [8, 32], strides = [1, 1]} : vector<8x96xf32> to vector<8x32xf32>
    %52 = vector.extract_strided_slice %49 {offsets = [0, 64], sizes = [8, 32], strides = [1, 1]} : vector<8x96xf32> to vector<8x32xf32>
    %53 = vector.extract_strided_slice %43 {offsets = [0, 96], sizes = [8, 32], strides = [1, 1]} : vector<8x128xf32> to vector<8x32xf32>
    %54 = math.tanh %53 : vector<8x32xf32>
    %55 = arith.mulf %51, %37 : vector<8x32xf32>
    %56 = arith.mulf %50, %54 : vector<8x32xf32>
    %57 = arith.addf %55, %56 : vector<8x32xf32>
    %58 = math.tanh %57 : vector<8x32xf32>
    %59 = arith.mulf %52, %58 : vector<8x32xf32>
    %c0_18 = arith.constant 0 : index
    %c0_19 = arith.constant 0 : index
    %60 = vector.load %arg12[%c0_18, %c0_19] : memref<8x32xf32, #tpu.memory_space<vmem>>, vector<8x32xf32>
    tpu.vector_store %arg12[%c0_18, %c0_19], %59 {strides = array<i32>} : memref<8x32xf32, #tpu.memory_space<vmem>>, vector<8x32xf32>,
    %c0_20 = arith.constant 0 : index
    %c0_21 = arith.constant 0 : index
    %61 = vector.load %arg13[%c0_20, %c0_21] : memref<8x32xf32, #tpu.memory_space<vmem>>, vector<8x32xf32>
    tpu.vector_store %arg13[%c0_20, %c0_21], %57 {strides = array<i32>} : memref<8x32xf32, #tpu.memory_space<vmem>>, vector<8x32xf32>,
    %c0_22 = arith.constant 0 : index
    %c0_23 = arith.constant 0 : index
    %62 = vector.load %arg7[%c0_22, %c0_23] : memref<32x128xf32, #tpu.memory_space<vmem>>, vector<32x128xf32>
    %cst_24 = arith.constant dense<0.000000e+00> : vector<8x128xf32>
    %63 = tpu.matmul %59, %62, %cst_24 {dimension_numbers = #tpu.dot_dimension_numbers<[1], [0], [0], [1], [0, 0, 1, 1], [], []>} : vector<8x32xf32>, vector<32x128xf32>, vector<8x128xf32> -> vector<8x128xf32>
    %c0_25 = arith.constant 0 : index
    %c0_26 = arith.constant 0 : index
    %64 = vector.load %arg8[%c0_25, %c0_26] : memref<1x128xf32, #tpu.memory_space<vmem>>, vector<1x128xf32>
    %65 = vector.broadcast %64 : vector<1x128xf32> to vector<8x128xf32>
    %66 = arith.addf %63, %65 : vector<8x128xf32>
    %c0_27 = arith.constant 0 : index
    %c0_28 = arith.constant 0 : index
    %c0_29 = arith.constant 0 : index
    %67 = vector.load %arg9[%c0_27, %c0_28, %c0_29] : memref<1x8x128xf32, #tpu.memory_space<vmem>>, vector<1x8x128xf32>
    %68 = vector.shape_cast %67 : vector<1x8x128xf32> to vector<8x128xf32>
    %69 = vector.shape_cast %66 : vector<8x128xf32> to vector<1x8x128xf32>
    tpu.vector_store %arg9[%c0_27, %c0_28, %c0_29], %69 {strides = array<i32>} : memref<1x8x128xf32, #tpu.memory_space<vmem>>, vector<1x8x128xf32>,
    %c11_i32 = arith.constant 11 : i32
    %70 = arith.cmpi eq, %arg0, %c11_i32 : i32
    %71 = arith.extui %70 : i1 to i32
    %c0_i32_30 = arith.constant 0 : i32
    %72 = arith.cmpi ne, %71, %c0_i32_30 : i32
    scf.if %72 {
      %c0_31 = arith.constant 0 : index
      %c0_32 = arith.constant 0 : index
      %73 = vector.load %arg10[%c0_31, %c0_32] : memref<8x32xf32, #tpu.memory_space<vmem>>, vector<8x32xf32>
      tpu.vector_store %arg10[%c0_31, %c0_32], %59 {strides = array<i32>} : memref<8x32xf32, #tpu.memory_space<vmem>>, vector<8x32xf32>,
      %c0_33 = arith.constant 0 : index
      %c0_34 = arith.constant 0 : index
      %74 = vector.load %arg11[%c0_33, %c0_34] : memref<8x32xf32, #tpu.memory_space<vmem>>, vector<8x32xf32>
      tpu.vector_store %arg11[%c0_33, %c0_34], %57 {strides = array<i32>} : memref<8x32xf32, #tpu.memory_space<vmem>>, vector<8x32xf32>,
    } else {
    }
    return
  }
  func.func @transform_0(%arg0: i32, %arg1: memref<12x8xi32, #tpu.memory_space<smem>>) -> (i32, i32) {
    %c0_i32 = arith.constant 0 : i32
    %c0_i32_0 = arith.constant 0 : i32
    %c0_i32_1 = arith.constant 0 : i32
    return %c0_i32, %c0_i32_0 : i32, i32
  }
  func.func @transform_1(%arg0: i32, %arg1: memref<12x8xi32, #tpu.memory_space<smem>>) -> (i32, i32) {
    %c0_i32 = arith.constant 0 : i32
    %c0_i32_0 = arith.constant 0 : i32
    %c0_i32_1 = arith.constant 0 : i32
    return %c0_i32, %c0_i32_0 : i32, i32
  }
  func.func @transform_2(%arg0: i32, %arg1: memref<12x8xi32, #tpu.memory_space<smem>>) -> (i32, i32) {
    %c0_i32 = arith.constant 0 : i32
    %c0_i32_0 = arith.constant 0 : i32
    %c0_i32_1 = arith.constant 0 : i32
    return %c0_i32, %c0_i32_0 : i32, i32
  }
  func.func @transform_3(%arg0: i32, %arg1: memref<12x8xi32, #tpu.memory_space<smem>>) -> (i32, i32) {
    %c0_i32 = arith.constant 0 : i32
    %c0_i32_0 = arith.constant 0 : i32
    %c0_i32_1 = arith.constant 0 : i32
    return %c0_i32, %c0_i32_0 : i32, i32
  }
  func.func @transform_4(%arg0: i32, %arg1: memref<12x8xi32, #tpu.memory_space<smem>>) -> (i32, i32) {
    %c0_i32 = arith.constant 0 : i32
    %c0_i32_0 = arith.constant 0 : i32
    %c0_i32_1 = arith.constant 0 : i32
    return %c0_i32, %c0_i32_0 : i32, i32
  }
  func.func @transform_5(%arg0: i32, %arg1: memref<12x8xi32, #tpu.memory_space<smem>>) -> (i32, i32) {
    %c0_i32 = arith.constant 0 : i32
    %c0_i32_0 = arith.constant 0 : i32
    %c0_i32_1 = arith.constant 0 : i32
    return %c0_i32, %c0_i32_0 : i32, i32
  }
  func.func @transform_6(%arg0: i32, %arg1: memref<12x8xi32, #tpu.memory_space<smem>>) -> (i32, i32) {
    %c0_i32 = arith.constant 0 : i32
    %c0_i32_0 = arith.constant 0 : i32
    %c0_i32_1 = arith.constant 0 : i32
    return %c0_i32, %c0_i32_0 : i32, i32
  }
  func.func @transform_7(%arg0: i32, %arg1: memref<12x8xi32, #tpu.memory_space<smem>>) -> (i32, i32, i32) {
    %c0_i32 = arith.constant 0 : i32
    %c0_i32_0 = arith.constant 0 : i32
    %c0_i32_1 = arith.constant 0 : i32
    return %arg0, %c0_i32, %c0_i32_0 : i32, i32, i32
  }
  func.func @transform_8(%arg0: i32, %arg1: memref<12x8xi32, #tpu.memory_space<smem>>) -> (i32, i32) {
    %c0_i32 = arith.constant 0 : i32
    %c0_i32_0 = arith.constant 0 : i32
    %c0_i32_1 = arith.constant 0 : i32
    return %c0_i32, %c0_i32_0 : i32, i32
  }
  func.func @transform_9(%arg0: i32, %arg1: memref<12x8xi32, #tpu.memory_space<smem>>) -> (i32, i32) {
    %c0_i32 = arith.constant 0 : i32
    %c0_i32_0 = arith.constant 0 : i32
    %c0_i32_1 = arith.constant 0 : i32
    return %c0_i32, %c0_i32_0 : i32, i32
  }
}

</mosaic_0001>

<llo_original>
// kernel: tpu_custom_call.1
$region0: #{tpu_custom_call.1}
  #allocation0 [shape = 'u32[]', space=smem, size = 0x4, offset = 0x4, fixed_abs, tag = 'smem constant byte address 0x4 - core index']
  #allocation1 [shape = 'u32[144,128]{1,0:T(1,128)}', space=vmem, size = 0x12000, scoped, tag = 'internal scratch']
  #allocation2 [shape = 'f32[8,32]{1,0:T(8,128)}', space=vmem, size = 0x1000, scoped, tag = 'scratch operand']
  #allocation3 [shape = 'f32[8,32]{1,0:T(8,128)}', space=vmem, size = 0x1000, scoped, tag = 'scratch operand']
  #allocation4 [shape = 's32[1]{0}', space=sflag, size = 0x4, scoped, tag = 'scoped memory for tpu_custom_call.1']
  #allocation5 [shape = 'u8[8192]{0}', space=smem, size = 0x2000, scoped, tag = 'prefetched SMEM operand 0']
  %s0 = inlined_call_operand.vmem [shape: s32[12,8], index: 0, kind: input, shape index: {}]
  %s1 = inlined_call_operand.hbm [shape: f32[8,32], index: 1, kind: input, shape index: {}]
  %s2 = inlined_call_operand.hbm [shape: f32[8,32], index: 2, kind: input, shape index: {}]
  %s3 = inlined_call_operand.vmem [shape: f32[30,16], index: 3, kind: input, shape index: {}]
  %s4 = inlined_call_operand.vmem [shape: f32[48,128], index: 4, kind: input, shape index: {}]
  %s5 = inlined_call_operand.vmem [shape: f32[1,128], index: 5, kind: input, shape index: {}]
  %s6 = inlined_call_operand.vmem [shape: f32[32,128], index: 6, kind: input, shape index: {}]
  %s7 = inlined_call_operand.vmem [shape: f32[1,128], index: 7, kind: input, shape index: {}]
  %s8 = inlined_call_operand.hbm [shape: f32[12,8,128], index: 8, kind: output, shape index: {0}]
  %s9 = inlined_call_operand.hbm [shape: f32[8,32], index: 9, kind: output, shape index: {1}]
  %s10 = inlined_call_operand.hbm [shape: f32[8,32], index: 10, kind: output, shape index: {2}]
  %11 = xla_tuple %s8, %s9, %s10
  %s12 = sld [smem:[#allocation0]]
  $region93: #{tpu_custom_call.1} parent=0
    _
  %s14 = ssub.s32 1, %s12
  %s15 = scalar_select 0, %s14, %s12
  %s16 = sshll.u32 %s0, 4
  %s17 = int_to_ptr.vmem [resolvable:$true] %s16
  %19 = dma.vmem_to_smem %s17, 256, [#allocation5], [#allocation4]
  %20 = dma.done [#allocation4], 256
  %21 = sfence
  $region1: #{tpu_custom_call.1} parent=0
    #allocation6 [shape = 'u8[4096]{0}', space=vmem, size = 0x1000, scoped, tag = 'input window, operand 1, single buffered']
    #allocation7 [shape = 's32[2]{0}', space=sflag, size = 0x8, scoped, tag = 'scoped memory for tpu_custom_call.1']
    #allocation8 [shape = 's32[2]{0}', space=sflag, size = 0x8, scoped, tag = 'scoped memory for tpu_custom_call.1']
    #allocation9 [shape = 'u8[4096]{0}', space=vmem, size = 0x1000, scoped, tag = 'input window, operand 2, single buffered']
    #allocation10 [shape = 's32[1]{0}', space=sflag, size = 0x4, scoped, tag = 'scoped memory for tpu_custom_call.1']
    #allocation11 [shape = 'u8[8192]{0}', space=vmem, size = 0x2000, scoped, tag = 'output window, operand 0']
    #allocation12 [shape = 'u8[4096]{0}', space=vmem, size = 0x1000, scoped, tag = 'output window, operand 1, single buffered']
    #allocation13 [shape = 's32[1]{0}', space=sflag, size = 0x4, scoped, tag = 'scoped memory for tpu_custom_call.1']
    #allocation14 [shape = 'u8[4096]{0}', space=vmem, size = 0x1000, scoped, tag = 'output window, operand 2, single buffered']
    %22 = vsyncpa [#allocation7], 0
    %23 = vsyncpa [#allocation10], 0
    %24 = vsyncpa [#allocation8], 0
    %s25 = scalar_lea.sflag [#allocation8], 1
    %26 = vsyncpa %s25, 0
    %27 = vsyncpa [#allocation13], 0
    loop: start=0, step=1, limit=14
    $region2: #{tpu_custom_call.1} parent=1 // loop_pre_header
      _
    $region3: #{tpu_custom_call.1} parent=1 // loop_header
      %s29 = sphi 0, %s33
      %p30 = scmp.ge.s32.totalorder %s29, 14
      %s37 = sphi 0, %s37
      %s39 = sphi 0, %s37
      %s40 = sphi 0, %s39
      %s54 = sphi 0, %s40
      %s58 = sphi 0, %s58
      %s60 = sphi 0, %s58
      %s61 = sphi 0, %s60
      %s75 = sphi 0, %s61
      %s79 = sphi 0, %s79
      %s81 = sphi 0, %s79
      %s82 = sphi 0, %s81
      %s96 = sphi 0, %s82
      %s100 = sphi 0, %s100
      %s102 = sphi 0, %s100
      %s103 = sphi 0, %s102
      %s117 = sphi 0, %s103
      %s121 = sphi 0, %s121
      %s123 = sphi 0, %s121
      %s124 = sphi 0, %s123
      %s138 = sphi 0, %s124
      %s142 = sphi 0, %s142
      %s144 = sphi 0, %s142
      %s145 = sphi 0, %s144
      %s159 = sphi 0, %s145
      %s163 = sphi 0, %s163
      %s165 = sphi 0, %s163
      %s166 = sphi 0, %s165
      %s180 = sphi 0, %s166
      %s186 = sphi 0, %s188
      %s189 = sphi 0, %s186
      %s190 = sphi 0, %s189
      %s206 = sphi 0, %s190
      %s210 = sphi 0, %s210
      %s212 = sphi 0, %s210
      %s213 = sphi 0, %s212
      %s227 = sphi 0, %s213
      %s231 = sphi 0, %s231
      %s233 = sphi 0, %s231
      %s234 = sphi 0, %s233
      %s248 = sphi 0, %s234
    $region4: #{tpu_custom_call.1} parent=1 // loop_header_branch
      %32 = sbr.rel (%p30) target = $region8
    $region5: #{tpu_custom_call.1} parent=1 // loop_body
      %s34 = ssub.s32 %s29, 1
      %s35 = ssub.s32 %s29, 2
      %s36 = sadd.s32 %s29, 1
      %s38 = sadd.s32 %s37, 1
      %p41 = scmp.eq.s32.totalorder %s29, 11
      %p42 = scmp.ne.s32.totalorder %s37, %s39
      %p43 = scmp.eq.s32.totalorder %s29, 0
      %p44 = por %p42, %p43
      %p45 = scmp.ne.s32.totalorder %s37, %s39
      %p46 = scmp.eq.s32.totalorder %s34, 11
      %p47 = por %p45, %p46
      %p48 = scmp.ne.s32.totalorder %s39, %s40
      %p49 = scmp.eq.s32.totalorder %s34, 0
      %p50 = por %p48, %p49
      %p51 = scmp.ne.s32.totalorder %s39, %s40
      %p52 = scmp.eq.s32.totalorder %s35, 11
      %p53 = por %p51, %p52
      %p55 = scmp.ne.s32.totalorder %s40, %s54
      %p56 = scmp.eq.s32.totalorder %s35, 0
      %p57 = por %p55, %p56
      %s59 = sadd.s32 %s58, 1
      %p62 = scmp.eq.s32.totalorder %s29, 11
      %p63 = scmp.ne.s32.totalorder %s58, %s60
      %p64 = scmp.eq.s32.totalorder %s29, 0
      %p65 = por %p63, %p64
      %p66 = scmp.ne.s32.totalorder %s58, %s60
      %p67 = scmp.eq.s32.totalorder %s34, 11
      %p68 = por %p66, %p67
      %p69 = scmp.ne.s32.totalorder %s60, %s61
      %p70 = scmp.eq.s32.totalorder %s34, 0
      %p71 = por %p69, %p70
      %p72 = scmp.ne.s32.totalorder %s60, %s61
      %p73 = scmp.eq.s32.totalorder %s35, 11
      %p74 = por %p72, %p73
      %p76 = scmp.ne.s32.totalorder %s61, %s75
      %p77 = scmp.eq.s32.totalorder %s35, 0
      %p78 = por %p76, %p77
      %s80 = sadd.s32 %s79, 1
      %p83 = scmp.eq.s32.totalorder %s29, 11
      %p84 = scmp.ne.s32.totalorder %s79, %s81
      %p85 = scmp.eq.s32.totalorder %s29, 0
      %p86 = por %p84, %p85
      %p87 = scmp.ne.s32.totalorder %s79, %s81
      %p88 = scmp.eq.s32.totalorder %s34, 11
      %p89 = por %p87, %p88
      %p90 = scmp.ne.s32.totalorder %s81, %s82
      %p91 = scmp.eq.s32.totalorder %s34, 0
      %p92 = por %p90, %p91
      %p93 = scmp.ne.s32.totalorder %s81, %s82
      %p94 = scmp.eq.s32.totalorder %s35, 11
      %p95 = por %p93, %p94
      %p97 = scmp.ne.s32.totalorder %s82, %s96
      %p98 = scmp.eq.s32.totalorder %s35, 0
      %p99 = por %p97, %p98
      %s101 = sadd.s32 %s100, 1
      %p104 = scmp.eq.s32.totalorder %s29, 11
      %p105 = scmp.ne.s32.totalorder %s100, %s102
      %p106 = scmp.eq.s32.totalorder %s29, 0
      %p107 = por %p105, %p106
      %p108 = scmp.ne.s32.totalorder %s100, %s102
      %p109 = scmp.eq.s32.totalorder %s34, 11
      %p110 = por %p108, %p109
      %p111 = scmp.ne.s32.totalorder %s102, %s103
      %p112 = scmp.eq.s32.totalorder %s34, 0
      %p113 = por %p111, %p112
      %p114 = scmp.ne.s32.totalorder %s102, %s103
      %p115 = scmp.eq.s32.totalorder %s35, 11
      %p116 = por %p114, %p115
      %p118 = scmp.ne.s32.totalorder %s103, %s117
      %p119 = scmp.eq.s32.totalorder %s35, 0
      %p120 = por %p118, %p119
      %s122 = sadd.s32 %s121, 1
      %p125 = scmp.eq.s32.totalorder %s29, 11
      %p126 = scmp.ne.s32.totalorder %s121, %s123
      %p127 = scmp.eq.s32.totalorder %s29, 0
      %p128 = por %p126, %p127
      %p129 = scmp.ne.s32.totalorder %s121, %s123
      %p130 = scmp.eq.s32.totalorder %s34, 11
      %p131 = por %p129, %p130
      %p132 = scmp.ne.s32.totalorder %s123, %s124
      %p133 = scmp.eq.s32.totalorder %s34, 0
      %p134 = por %p132, %p133
      %p135 = scmp.ne.s32.totalorder %s123, %s124
      %p136 = scmp.eq.s32.totalorder %s35, 11
      %p137 = por %p135, %p136
      %p139 = scmp.ne.s32.totalorder %s124, %s138
      %p140 = scmp.eq.s32.totalorder %s35, 0
      %p141 = por %p139, %p140
      %s143 = sadd.s32 %s142, 1
      %p146 = scmp.eq.s32.totalorder %s29, 11
      %p147 = scmp.ne.s32.totalorder %s142, %s144
      %p148 = scmp.eq.s32.totalorder %s29, 0
      %p149 = por %p147, %p148
      %p150 = scmp.ne.s32.totalorder %s142, %s144
      %p151 = scmp.eq.s32.totalorder %s34, 11
      %p152 = por %p150, %p151
      %p153 = scmp.ne.s32.totalorder %s144, %s145
      %p154 = scmp.eq.s32.totalorder %s34, 0
      %p155 = por %p153, %p154
      %p156 = scmp.ne.s32.totalorder %s144, %s145
      %p157 = scmp.eq.s32.totalorder %s35, 11
      %p158 = por %p156, %p157
      %p160 = scmp.ne.s32.totalorder %s145, %s159
      %p161 = scmp.eq.s32.totalorder %s35, 0
      %p162 = por %p160, %p161
      %s164 = sadd.s32 %s163, 1
      %p167 = scmp.eq.s32.totalorder %s29, 11
      %p168 = scmp.ne.s32.totalorder %s163, %s165
      %p169 = scmp.eq.s32.totalorder %s29, 0
      %p170 = por %p168, %p169
      %p171 = scmp.ne.s32.totalorder %s163, %s165
      %p172 = scmp.eq.s32.totalorder %s34, 11
      %p173 = por %p171, %p172
      %p174 = scmp.ne.s32.totalorder %s165, %s166
      %p175 = scmp.eq.s32.totalorder %s34, 0
      %p176 = por %p174, %p175
      %p177 = scmp.ne.s32.totalorder %s165, %s166
      %p178 = scmp.eq.s32.totalorder %s35, 11
      %p179 = por %p177, %p178
      %p181 = scmp.ne.s32.totalorder %s166, %s180
      %p182 = scmp.eq.s32.totalorder %s35, 0
      %p183 = por %p181, %p182
      %s184 = ssub.s32 %s29, %s36
      %p185 = scmp.eq.s32.totalorder %s184, 0
      %s187 = sadd.s32 %s186, 1
      %s188 = scalar_select %p185, %s186, %s187
      %p191 = pneg %p185
      %p192 = scmp.eq.s32.totalorder %s29, 11
      %p193 = por %p191, %p192
      %p194 = scmp.ne.s32.totalorder %s186, %s189
      %p195 = scmp.eq.s32.totalorder %s29, 0
      %p196 = por %p194, %p195
      %p197 = scmp.ne.s32.totalorder %s186, %s189
      %p198 = scmp.eq.s32.totalorder %s34, 11
      %p199 = por %p197, %p198
      %p200 = scmp.ne.s32.totalorder %s189, %s190
      %p201 = scmp.eq.s32.totalorder %s34, 0
      %p202 = por %p200, %p201
      %p203 = scmp.ne.s32.totalorder %s189, %s190
      %p204 = scmp.eq.s32.totalorder %s35, 11
      %p205 = por %p203, %p204
      %p207 = scmp.ne.s32.totalorder %s190, %s206
      %p208 = scmp.eq.s32.totalorder %s35, 0
      %p209 = por %p207, %p208
      %s211 = sadd.s32 %s210, 1
      %p214 = scmp.eq.s32.totalorder %s29, 11
      %p215 = scmp.ne.s32.totalorder %s210, %s212
      %p216 = scmp.eq.s32.totalorder %s29, 0
      %p217 = por %p215, %p216
      %p218 = scmp.ne.s32.totalorder %s210, %s212
      %p219 = scmp.eq.s32.totalorder %s34, 11
      %p220 = por %p218, %p219
      %p221 = scmp.ne.s32.totalorder %s212, %s213
      %p222 = scmp.eq.s32.totalorder %s34, 0
      %p223 = por %p221, %p222
      %p224 = scmp.ne.s32.totalorder %s212, %s213
      %p225 = scmp.eq.s32.totalorder %s35, 11
      %p226 = por %p224, %p225
      %p228 = scmp.ne.s32.totalorder %s213, %s227
      %p229 = scmp.eq.s32.totalorder %s35, 0
      %p230 = por %p228, %p229
      %s232 = sadd.s32 %s231, 1
      %p235 = scmp.eq.s32.totalorder %s29, 11
      %p236 = scmp.ne.s32.totalorder %s231, %s233
      %p237 = scmp.eq.s32.totalorder %s29, 0
      %p238 = por %p236, %p237
      %p239 = scmp.ne.s32.totalorder %s231, %s233
      %p240 = scmp.eq.s32.totalorder %s34, 11
      %p241 = por %p239, %p240
      %p242 = scmp.ne.s32.totalorder %s233, %s234
      %p243 = scmp.eq.s32.totalorder %s34, 0
      %p244 = por %p242, %p243
      %p245 = scmp.ne.s32.totalorder %s233, %s234
      %p246 = scmp.eq.s32.totalorder %s35, 11
      %p247 = por %p245, %p246
      %p249 = scmp.ne.s32.totalorder %s234, %s248
      %p250 = scmp.eq.s32.totalorder %s35, 0
      %p251 = por %p249, %p250
      %p252 = scmp.le.s32.totalorder 1, %s29
      %p253 = scmp.lt.s32.totalorder %s29, 13
      %p254 = pnand %p252, %p253
      %p255 = pneg %p254
      // Predicated region
      $region9: #{tpu_custom_call.1} parent=5 // pred_check
        _
      $region10: #{tpu_custom_call.1} parent=5 // pred_check_branch
        %257 = sbr.rel (%p254) target = $region12
      $region11: #{tpu_custom_call.1} parent=5 // pred_region
        %s258 = ssub.s32 %s29, 1
        // Predicated region
        $region13: #{tpu_custom_call.1} parent=11 // pred_check
          %p259 = pneg %p50
        $region14: #{tpu_custom_call.1} parent=11 // pred_check_branch
          %261 = sbr.rel (%p259) target = $region16
        $region15: #{tpu_custom_call.1} parent=11 // pred_region
          %s263 = ssub.s32 128, 128
          %264 = vsyncadd [#allocation7], %s263
          %s266 = sshll.u32 [#allocation6], 4
          %s267 = int_to_ptr.vmem [resolvable:$true] %s266
          %269 = dma.hbm_to_vmem [thread:$0]  %s1, 128, %s267, [#allocation7]
        $region16: #{tpu_custom_call.1} parent=11 // pred_fallthru
          _
        // Predicated region
        $region17: #{tpu_custom_call.1} parent=11 // pred_check
          %p270 = pneg %p71
        $region18: #{tpu_custom_call.1} parent=11 // pred_check_branch
          %272 = sbr.rel (%p270) target = $region20
        $region19: #{tpu_custom_call.1} parent=11 // pred_region
          %s274 = ssub.s32 128, 128
          %275 = vsyncadd [#allocation10], %s274
          %s277 = sshll.u32 [#allocation9], 4
          %s278 = int_to_ptr.vmem [resolvable:$true] %s277
          %280 = dma.hbm_to_vmem [thread:$0]  %s2, 128, %s278, [#allocation10]
        $region20: #{tpu_custom_call.1} parent=11 // pred_fallthru
          _
        // Predicated region
        $region21: #{tpu_custom_call.1} parent=11 // pred_check
          %p281 = pneg %p92
        $region22: #{tpu_custom_call.1} parent=11 // pred_check_branch
          %283 = sbr.rel (%p281) target = $region24
        $region23: #{tpu_custom_call.1} parent=11 // pred_region
          _
        $region24: #{tpu_custom_call.1} parent=11 // pred_fallthru
          _
        // Predicated region
        $region25: #{tpu_custom_call.1} parent=11 // pred_check
          %p284 = pneg %p113
        $region26: #{tpu_custom_call.1} parent=11 // pred_check_branch
          %286 = sbr.rel (%p284) target = $region28
        $region27: #{tpu_custom_call.1} parent=11 // pred_region
          _
        $region28: #{tpu_custom_call.1} parent=11 // pred_fallthru
          _
        // Predicated region
        $region29: #{tpu_custom_call.1} parent=11 // pred_check
          %p287 = pneg %p134
        $region30: #{tpu_custom_call.1} parent=11 // pred_check_branch
          %289 = sbr.rel (%p287) target = $region32
        $region31: #{tpu_custom_call.1} parent=11 // pred_region
          _
        $region32: #{tpu_custom_call.1} parent=11 // pred_fallthru
          _
        // Predicated region
        $region33: #{tpu_custom_call.1} parent=11 // pred_check
          %p290 = pneg %p155
        $region34: #{tpu_custom_call.1} parent=11 // pred_check_branch
          %292 = sbr.rel (%p290) target = $region36
        $region35: #{tpu_custom_call.1} parent=11 // pred_region
          _
        $region36: #{tpu_custom_call.1} parent=11 // pred_fallthru
          _
        // Predicated region
        $region37: #{tpu_custom_call.1} parent=11 // pred_check
          %p293 = pneg %p176
        $region38: #{tpu_custom_call.1} parent=11 // pred_check_branch
          %295 = sbr.rel (%p293) target = $region40
        $region39: #{tpu_custom_call.1} parent=11 // pred_region
          _
        $region40: #{tpu_custom_call.1} parent=11 // pred_fallthru
          _
      $region12: #{tpu_custom_call.1} parent=5 // pred_fallthru
        _
      %p296 = scmp.lt.s32.totalorder %s29, 12
      // Predicated region
      $region41: #{tpu_custom_call.1} parent=5 // pred_check
        %p297 = pneg %p296
      $region42: #{tpu_custom_call.1} parent=5 // pred_check_branch
        %299 = sbr.rel (%p297) target = $region44
      $region43: #{tpu_custom_call.1} parent=5 // pred_region
        _
      $region44: #{tpu_custom_call.1} parent=5 // pred_fallthru
        _
      %p300 = scmp.le.s32.totalorder 1, %s29
      %p301 = scmp.lt.s32.totalorder %s29, 13
      %p302 = pnand %p300, %p301
      %p303 = pneg %p302
      // Predicated region
      $region45: #{tpu_custom_call.1} parent=5 // pred_check
        _
      $region46: #{tpu_custom_call.1} parent=5 // pred_check_branch
        %305 = sbr.rel (%p302) target = $region48
      $region47: #{tpu_custom_call.1} parent=5 // pred_region
        %s306 = ssub.s32 %s29, 1
        // Predicated region
        $region49: #{tpu_custom_call.1} parent=47 // pred_check
          %p307 = pneg %p50
        $region50: #{tpu_custom_call.1} parent=47 // pred_check_branch
          %309 = sbr.rel (%p307) target = $region52
        $region51: #{tpu_custom_call.1} parent=47 // pred_region
          %310 = dma.done [#allocation7], 128
        $region52: #{tpu_custom_call.1} parent=47 // pred_fallthru
          _
        // Predicated region
        $region53: #{tpu_custom_call.1} parent=47 // pred_check
          %p311 = pneg %p71
        $region54: #{tpu_custom_call.1} parent=47 // pred_check_branch
          %313 = sbr.rel (%p311) target = $region56
        $region55: #{tpu_custom_call.1} parent=47 // pred_region
          %314 = dma.done [#allocation10], 128
        $region56: #{tpu_custom_call.1} parent=47 // pred_fallthru
          _
        %p315 = pneg %p50
        %p316 = pneg %p47
        %p317 = pneg %p71
        %p318 = pneg %p68
        %p319 = pneg %p92
        %p320 = pneg %p89
        %p321 = pneg %p113
        %p322 = pneg %p110
        %p323 = pneg %p134
        %p324 = pneg %p131
        %p325 = pneg %p155
        %p326 = pneg %p152
        %p327 = pneg %p176
        %p328 = pneg %p173
        %p329 = pneg %p202
        %p330 = pneg %p199
        %s331 = sand.u32 %s189, 1
        %s332 = scalar_lea.sflag [#allocation8], %s331
        %s333 = sand.u32 %s189, 1
        %s334 = smul.addr %s333, 8
        %s335 = scalar_lea.vmem [#allocation11], %s334
        %p336 = pneg %p223
        %p337 = pneg %p220
        %p338 = pneg %p244
        %p339 = pneg %p241
        %p340 = scmp.eq.s32.totalorder %s34, 0
        // Predicated region
        $region57: #{tpu_custom_call.1} parent=47 // pred_check
          %p341 = pneg %p340
        $region58: #{tpu_custom_call.1} parent=47 // pred_check_branch
          %343 = sbr.rel (%p341) target = $region60
        $region59: #{tpu_custom_call.1} parent=47 // pred_region
          %v344 = vld [vmem:[#allocation6] sm:$0xff]
          %vm345 = vcmask 261120
          %346 = vst.msk [vmem:[#allocation2] sm:$0xff] %vm345, %v344
          %v347 = vld [vmem:[#allocation9] sm:$0xff]
          %348 = vst.msk [vmem:[#allocation3] sm:$0xff] %vm345, %v347
        $region60: #{tpu_custom_call.1} parent=47 // pred_fallthru
          _
        %s349 = smul.u32 %s34, 128
        %s350 = sld [smem:[#allocation5 + %s349]]
        %s351 = scalar_lea.vmem %s3, %s350
        %v352 = vld [vmem:[%s351] sm:$0x1]
        %s353 = sadd.s32 %s349, 1
        %s354 = sld [smem:[#allocation5 + %s353]]
        %s355 = scalar_lea.vmem %s3, %s354
        %v356 = vld [vmem:[%s355] sm:$0x1]
        %s357 = sadd.s32 %s349, 2
        %s358 = sld [smem:[#allocation5 + %s357]]
        %s359 = scalar_lea.vmem %s3, %s358
        %v360 = vld [vmem:[%s359] sm:$0x1]
        %s361 = sadd.s32 %s349, 3
        %s362 = sld [smem:[#allocation5 + %s361]]
        %s363 = scalar_lea.vmem %s3, %s362
        %v364 = vld [vmem:[%s363] sm:$0x1]
        %s365 = sadd.s32 %s349, 4
        %s366 = sld [smem:[#allocation5 + %s365]]
        %s367 = scalar_lea.vmem %s3, %s366
        %v368 = vld [vmem:[%s367] sm:$0x1]
        %s369 = sadd.s32 %s349, 5
        %s370 = sld [smem:[#allocation5 + %s369]]
        %s371 = scalar_lea.vmem %s3, %s370
        %v372 = vld [vmem:[%s371] sm:$0x1]
        %s373 = sadd.s32 %s349, 6
        %s374 = sld [smem:[#allocation5 + %s373]]
        %s375 = scalar_lea.vmem %s3, %s374
        %v376 = vld [vmem:[%s375] sm:$0x1]
        %s377 = sadd.s32 %s349, 7
        %s378 = sld [smem:[#allocation5 + %s377]]
        %s379 = scalar_lea.vmem %s3, %s378
        %v380 = vld [vmem:[%s379] sm:$0x1]
        %v382 = vrot.slane %v356, 7
        %v385 = vrot.slane %v360, 6
        %v388 = vrot.slane %v364, 5
        %v391 = vrot.slane %v368, 4
        %v394 = vrot.slane %v372, 3
        %v397 = vrot.slane %v376, 2
        %v400 = vrot.slane %v380, 1
        %vm402 = vcmask 1040384
        %v403 = vsel %vm402, %v352, %v382
        %vm404 = vcmask 1041408
        %v405 = vsel %vm404, %v403, %v385
        %vm406 = vcmask 1042432
        %v407 = vsel %vm406, %v405, %v388
        %vm408 = vcmask 1043456
        %v409 = vsel %vm408, %v407, %v391
        %vm410 = vcmask 1044480
        %v411 = vsel %vm410, %v409, %v394
        %vm412 = vcmask 1045504
        %v413 = vsel %vm412, %v411, %v397
        %vm414 = vcmask 1046528
        %v415 = vsel %vm414, %v413, %v400
        %v416 = vld [vmem:[#allocation2] sm:$0xff]
        %v417 = vld [vmem:[#allocation3] sm:$0xff]
        %419 = vrot.lane.b32.xlu0 %v416, 16
        %v420 = vpop.permute.xlu0 %419
        %vm422 = vcmask 130048
        %v423 = vsel %vm422, %v415, %v420
        %v424 = vld [vmem:[%s4] sm:$0xff]
        %v425 = vld [vmem:[%s4 + $0x8] sm:$0xff]
        %v426 = vld [vmem:[%s4 + $0x10] sm:$0xff]
        %v427 = vld [vmem:[%s4 + $0x18] sm:$0xff]
        %v428 = vld [vmem:[%s4 + $0x20] sm:$0xff]
        %v429 = vld [vmem:[%s4 + $0x28] sm:$0xff]
        %v430 = vld [vmem:[%s5] sm:$0x1]
        %v432 = vlaneseq
        %v433 = vshrl.u32 %v432, 7
        %v434 = vsub.s32 0, %v433
        %v435 = vrot.slane %v430, %v434
        %vm437 = vcmask 392192
        %v439 = vsel %vm437, %v423, 0
        %441 = vmatprep.subr.mxu0 0.0
        %442 = vmatpush1.msra.mxu0 %v424
        %443 = vmatprep.subr.mxu0 0.0
        %444 = vmatpush1.msra.mxu0 %v425
        %445 = vmatprep.subr.mxu0 0.0
        %446 = vmatpush1.msra.mxu0 %v426
        %447 = vmatprep.subr.mxu0 0.0
        %448 = vmatpush1.msra.mxu0 %v427
        %449 = vmatprep.subr.mxu0 0.0
        %450 = vmatpush1.msra.mxu0 %v428
        %451 = vmatprep.subr.mxu0 0.0
        %452 = vmatpush1.msra.mxu0 %v429
        %453 = vmatprep.subr.mxu0 0.0
        %454 = vmatpush1.msra.mxu0 0.0
        %455 = vmatprep.subr.mxu0 0.0
        %456 = vmatpush1.msra.mxu0 0.0
        %457 = vmatprep.subr.mxu0 0.0
        %458 = vmatpush1.msra.mxu0 0.0
        %459 = vmatprep.subr.mxu0 0.0
        %460 = vmatpush1.msra.mxu0 0.0
        %461 = vmatprep.subr.mxu0 0.0
        %462 = vmatpush1.msra.mxu0 0.0
        %463 = vmatprep.subr.mxu0 0.0
        %464 = vmatpush1.msra.mxu0 0.0
        %465 = vmatprep.subr.mxu0 0.0
        %466 = vmatpush1.msra.mxu0 0.0
        %467 = vmatprep.subr.mxu0 0.0
        %468 = vmatpush1.msra.mxu0 0.0
        %469 = vmatprep.subr.mxu0 0.0
        %470 = vmatpush1.msra.mxu0 0.0
        %471 = vmatprep.subr.mxu0 0.0
        %472 = vmatpush1.msra.mxu0 0.0
        %473 = vmatprep.subr.mxu0 0.0
        %474 = vmatpush1.msra.mxu0 0.0
        %475 = vmatprep.subr.mxu0 0.0
        %476 = vmatpush1.msra.mxu0 0.0
        %477 = vmatprep.subr.mxu0 0.0
        %478 = vmatpush1.msra.mxu0 0.0
        %479 = vmatprep.subr.mxu0 0.0
        %480 = vmatpush1.msra.mxu0 0.0
        %481 = vmatprep.subr.mxu0 0.0
        %482 = vmatpush1.msra.mxu0 0.0
        %483 = vmatprep.subr.mxu0 0.0
        %484 = vmatpush1.msra.mxu0 0.0
        %485 = vmatprep.subr.mxu0 0.0
        %486 = vmatpush1.msra.mxu0 0.0
        %487 = vmatprep.subr.mxu0 0.0
        %488 = vmatpush1.msra.mxu0 0.0
        %489 = vmatprep.subr.mxu0 0.0
        %490 = vmatpush1.msra.mxu0 0.0
        %491 = vmatprep.subr.mxu0 0.0
        %492 = vmatpush1.msra.mxu0 0.0
        %493 = vmatprep.subr.mxu0 0.0
        %494 = vmatpush1.msra.mxu0 0.0
        %495 = vmatprep.subr.mxu0 0.0
        %496 = vmatpush1.msra.mxu0 0.0
        %497 = vmatprep.subr.mxu0 0.0
        %498 = vmatpush1.msra.mxu0 0.0
        %499 = vmatprep.subr.mxu0 0.0
        %500 = vmatpush1.msra.mxu0 0.0
        %501 = vmatprep.subr.mxu0 0.0
        %502 = vmatpush1.msra.mxu0 0.0
        %503 = vmatprep.subr.mxu0 0.0
        %504 = vmatpush1.msra.mxu0 0.0
        %505 = vmatprep.mubr.f32.mxu0 0.0
        %506 = vmatmul.mubr.f32.gmra.mrb[0].mxu0 %v439
        %v507 = vpop.f32.mrb[0].mxu0
        %v508 = vadd.f32 %v435, %v507
        %v509 = vpop.f32.mrb[0].mxu0
        %510 = vdwg.mxu0
        %v511 = vxor.u32 %v508, 2147483648
        %v512 = vmul.f32 %v511, 1.442695
        %v513 = vpow.pop %v512
        %v514 = vadd.f32 %v513, 1.0
        %v515 = vrcp.pop %v514
        %v516 = vmul.f32 1.0, %v515
        %v517 = vtanh.pop %v508
        %519 = vrot.lane.b32.xlu0 %v417, 32
        %v520 = vpop.permute.xlu0 %519
        %v522 = vmul.f32 %v516, %v520
        %524 = vrot.lane.b32.xlu0 %v517, 32
        %v525 = vpop.permute.xlu0 %524
        %v527 = vmul.f32 %v516, %v525
        %529 = vrot.lane.b32.xlu0 %v527, 32
        %v530 = vpop.permute.xlu0 %529
        %v532 = vadd.f32 %v522, %v530
        %v533 = vtanh.pop %v532
        %535 = vrot.lane.b32.xlu0 %v533, 32
        %v536 = vpop.permute.xlu0 %535
        %v538 = vmul.f32 %v516, %v536
        %540 = vrot.lane.b32.xlu0 %v538, 64
        %v541 = vpop.permute.xlu0 %540
        %vm543 = vcmask 261120
        %544 = vst.msk [vmem:[#allocation2] sm:$0xff] %vm543, %v541
        %546 = vrot.lane.b32.xlu0 %v532, 96
        %v547 = vpop.permute.xlu0 %546
        %549 = vst.msk [vmem:[#allocation3] sm:$0xff] %vm543, %v547
        %v550 = vld [vmem:[%s6] sm:$0xff]
        %v551 = vld [vmem:[%s6 + $0x8] sm:$0xff]
        %v552 = vld [vmem:[%s6 + $0x10] sm:$0xff]
        %v553 = vld [vmem:[%s6 + $0x18] sm:$0xff]
        %v554 = vld [vmem:[%s7] sm:$0x1]
        %v556 = vlaneseq
        %v557 = vshrl.u32 %v556, 7
        %v558 = vsub.s32 0, %v557
        %v559 = vrot.slane %v554, %v558
        %v561 = vsel %vm543, %v541, 0
        %563 = vmatprep.subr.mxu0 0.0
        %564 = vmatpush1.msra.mxu0 %v550
        %565 = vmatprep.subr.mxu0 0.0
        %566 = vmatpush1.msra.mxu0 %v551
        %567 = vmatprep.subr.mxu0 0.0
        %568 = vmatpush1.msra.mxu0 %v552
        %569 = vmatprep.subr.mxu0 0.0
        %570 = vmatpush1.msra.mxu0 %v553
        %571 = vmatprep.subr.mxu0 0.0
        %572 = vmatpush1.msra.mxu0 0.0
        %573 = vmatprep.subr.mxu0 0.0
        %574 = vmatpush1.msra.mxu0 0.0
        %575 = vmatprep.subr.mxu0 0.0
        %576 = vmatpush1.msra.mxu0 0.0
        %577 = vmatprep.subr.mxu0 0.0
        %578 = vmatpush1.msra.mxu0 0.0
        %579 = vmatprep.subr.mxu0 0.0
        %580 = vmatpush1.msra.mxu0 0.0
        %581 = vmatprep.subr.mxu0 0.0
        %582 = vmatpush1.msra.mxu0 0.0
        %583 = vmatprep.subr.mxu0 0.0
        %584 = vmatpush1.msra.mxu0 0.0
        %585 = vmatprep.subr.mxu0 0.0
        %586 = vmatpush1.msra.mxu0 0.0
        %587 = vmatprep.subr.mxu0 0.0
        %588 = vmatpush1.msra.mxu0 0.0
        %589 = vmatprep.subr.mxu0 0.0
        %590 = vmatpush1.msra.mxu0 0.0
        %591 = vmatprep.subr.mxu0 0.0
        %592 = vmatpush1.msra.mxu0 0.0
        %593 = vmatprep.subr.mxu0 0.0
        %594 = vmatpush1.msra.mxu0 0.0
        %595 = vmatprep.subr.mxu0 0.0
        %596 = vmatpush1.msra.mxu0 0.0
        %597 = vmatprep.subr.mxu0 0.0
        %598 = vmatpush1.msra.mxu0 0.0
        %599 = vmatprep.subr.mxu0 0.0
        %600 = vmatpush1.msra.mxu0 0.0
        %601 = vmatprep.subr.mxu0 0.0
        %602 = vmatpush1.msra.mxu0 0.0
        %603 = vmatprep.subr.mxu0 0.0
        %604 = vmatpush1.msra.mxu0 0.0
        %605 = vmatprep.subr.mxu0 0.0
        %606 = vmatpush1.msra.mxu0 0.0
        %607 = vmatprep.subr.mxu0 0.0
        %608 = vmatpush1.msra.mxu0 0.0
        %609 = vmatprep.subr.mxu0 0.0
        %610 = vmatpush1.msra.mxu0 0.0
        %611 = vmatprep.subr.mxu0 0.0
        %612 = vmatpush1.msra.mxu0 0.0
        %613 = vmatprep.subr.mxu0 0.0
        %614 = vmatpush1.msra.mxu0 0.0
        %615 = vmatprep.subr.mxu0 0.0
        %616 = vmatpush1.msra.mxu0 0.0
        %617 = vmatprep.subr.mxu0 0.0
        %618 = vmatpush1.msra.mxu0 0.0
        %619 = vmatprep.subr.mxu0 0.0
        %620 = vmatpush1.msra.mxu0 0.0
        %621 = vmatprep.subr.mxu0 0.0
        %622 = vmatpush1.msra.mxu0 0.0
        %623 = vmatprep.subr.mxu0 0.0
        %624 = vmatpush1.msra.mxu0 0.0
        %625 = vmatprep.subr.mxu0 0.0
        %626 = vmatpush1.msra.mxu0 0.0
        %627 = vmatprep.mubr.f32.mxu0 0.0
        %628 = vmatmul.mubr.f32.gmra.mrb[0].mxu0 %v561
        %v629 = vpop.f32.mrb[0].mxu0
        %v630 = vadd.f32 %v559, %v629
        %v631 = vpop.f32.mrb[0].mxu0
        %632 = vdwg.mxu0
        %633 = vst [vmem:[%s335] sm:$0xff] %v630
        %p634 = scmp.eq.s32.totalorder %s34, 11
        // Predicated region
        $region61: #{tpu_custom_call.1} parent=47 // pred_check
          %p635 = pneg %p634
        $region62: #{tpu_custom_call.1} parent=47 // pred_check_branch
          %637 = sbr.rel (%p635) target = $region64
        $region63: #{tpu_custom_call.1} parent=47 // pred_region
          %638 = vst.msk [vmem:[#allocation12] sm:$0xff] %vm543, %v541
          %639 = vst.msk [vmem:[#allocation14] sm:$0xff] %vm543, %v547
        $region64: #{tpu_custom_call.1} parent=47 // pred_fallthru
          _
        %s640 = sand.u32 %s189, 1
        %s641 = scalar_lea.sflag [#allocation8], %s640
        %s642 = sand.u32 %s189, 1
        %s643 = smul.addr %s642, 8
        %s644 = scalar_lea.vmem [#allocation11], %s643
        // Predicated region
        $region65: #{tpu_custom_call.1} parent=47 // pred_check
          %p645 = pneg %p199
        $region66: #{tpu_custom_call.1} parent=47 // pred_check_branch
          %647 = sbr.rel (%p645) target = $region68
        $region67: #{tpu_custom_call.1} parent=47 // pred_region
          %s649 = ssub.s32 128, 128
          %650 = vsyncadd %s641, %s649
          %s651 = smul.addr %s34, 128
          %s652 = scalar_lea.hbm %s8, %s651
          %s654 = sshll.u32 %s644, 4
          %s655 = int_to_ptr.vmem [resolvable:$true] %s654
          %657 = dma.vmem_to_hbm [thread:$0]  %s655, 128, %s652, %s641
        $region68: #{tpu_custom_call.1} parent=47 // pred_fallthru
          _
        // Predicated region
        $region69: #{tpu_custom_call.1} parent=47 // pred_check
          %p658 = pneg %p220
        $region70: #{tpu_custom_call.1} parent=47 // pred_check_branch
          %660 = sbr.rel (%p658) target = $region72
        $region71: #{tpu_custom_call.1} parent=47 // pred_region
          %s662 = ssub.s32 128, 128
          %663 = vsyncadd [#allocation13], %s662
          %s665 = sshll.u32 [#allocation12], 4
          %s666 = int_to_ptr.vmem [resolvable:$true] %s665
          %668 = dma.vmem_to_hbm [thread:$0]  %s666, 128, %s9, [#allocation13]
        $region72: #{tpu_custom_call.1} parent=47 // pred_fallthru
          _
        // Predicated region
        $region73: #{tpu_custom_call.1} parent=47 // pred_check
          %p669 = pneg %p241
        $region74: #{tpu_custom_call.1} parent=47 // pred_check_branch
          %671 = sbr.rel (%p669) target = $region76
        $region75: #{tpu_custom_call.1} parent=47 // pred_region
          %s673 = ssub.s32 128, 128
          %674 = vsyncadd [#allocation13], %s673
          %s676 = sshll.u32 [#allocation14], 4
          %s677 = int_to_ptr.vmem [resolvable:$true] %s676
          %679 = dma.vmem_to_hbm [thread:$0]  %s677, 128, %s10, [#allocation13]
        $region76: #{tpu_custom_call.1} parent=47 // pred_fallthru
          _
        // Predicated region
        $region77: #{tpu_custom_call.1} parent=47 // pred_check
          %p680 = pneg %p220
        $region78: #{tpu_custom_call.1} parent=47 // pred_check_branch
          %682 = sbr.rel (%p680) target = $region80
        $region79: #{tpu_custom_call.1} parent=47 // pred_region
          %683 = dma.done [#allocation13], 128
        $region80: #{tpu_custom_call.1} parent=47 // pred_fallthru
          _
        // Predicated region
        $region81: #{tpu_custom_call.1} parent=47 // pred_check
          %p684 = pneg %p241
        $region82: #{tpu_custom_call.1} parent=47 // pred_check_branch
          %686 = sbr.rel (%p684) target = $region84
        $region83: #{tpu_custom_call.1} parent=47 // pred_region
          %687 = dma.done [#allocation13], 128
        $region84: #{tpu_custom_call.1} parent=47 // pred_fallthru
          _
      $region48: #{tpu_custom_call.1} parent=5 // pred_fallthru
        _
      %p688 = scmp.le.s32.totalorder 2, %s29
      // Predicated region
      $region85: #{tpu_custom_call.1} parent=5 // pred_check
        %p689 = pneg %p688
      $region86: #{tpu_custom_call.1} parent=5 // pred_check_branch
        %691 = sbr.rel (%p689) target = $region88
      $region87: #{tpu_custom_call.1} parent=5 // pred_region
        %s692 = ssub.s32 %s29, 2
        // Predicated region
        $region89: #{tpu_custom_call.1} parent=87 // pred_check
          %p693 = pneg %p205
        $region90: #{tpu_custom_call.1} parent=87 // pred_check_branch
          %695 = sbr.rel (%p693) target = $region92
        $region91: #{tpu_custom_call.1} parent=87 // pred_region
          %s696 = sand.u32 %s190, 1
          %s697 = scalar_lea.sflag [#allocation8], %s696
          %s698 = sand.u32 %s190, 1
          %s699 = smul.addr %s698, 8
          %s700 = scalar_lea.vmem [#allocation11], %s699
          %701 = dma.done %s697, 128
        $region92: #{tpu_custom_call.1} parent=87 // pred_fallthru
          _
      $region88: #{tpu_custom_call.1} parent=5 // pred_fallthru
        _
    $region6: #{tpu_custom_call.1} parent=1 // loop_footer
      %s33 = sadd.s32 1, %s29
    $region7: #{tpu_custom_call.1} parent=1 // loop_footer_branch
      %28 = sbr.rel target = $region3
    $region8: #{tpu_custom_call.1} parent=1 // loop_exit
      _
    %702 = vsyncpa [#allocation7], 1
    %s703 = scalar_lea.sflag [#allocation7], 1
    %704 = vsyncpa %s703, 1
    %705 = vsyncpa [#allocation10], 1
    %706 = vsyncpa [#allocation8], 1
    %s707 = scalar_lea.sflag [#allocation8], 1
    %708 = vsyncpa %s707, 1
    %709 = vsyncpa [#allocation13], 1

</llo_original>
